<compile_context>
chip_gen: v5e
topology: v5e:2x2
jax: 0.10.0
libtpu: 0.0.40
codegen_flags: <defaults>
</compile_context>

<pallas_src>
import functools

import jax
import jax.numpy as jnp
from jax.experimental import pallas as pl
from jax.experimental.pallas import tpu as pltpu

LANES = 128
SUBLANES = 8


def _round_up(x, m):
    return ((x + m - 1) // m) * m


def actor_kernel(x_ref,              # VMEM (TB, repr_dim)
                 w1_ref, b1_ref,     # VMEM (repr_dim, H), (1, H)     — resident
                 w2_ref, b2_ref,     # VMEM (H, H),        (1, H)     — resident
                 w3_ref, b3_ref,     # VMEM (H, A_pad),    (1, A_pad) — resident
                 mu_ref):            # VMEM (TB, A_pad) out (lane-dense)
    x = x_ref[...]
    # Linear 1 + ReLU
    h1 = jnp.dot(x, w1_ref[...], preferred_element_type=jnp.float32) + b1_ref[...]
    h1 = jnp.maximum(h1, 0.0)
    # Linear 2 + ReLU
    h2 = jnp.dot(h1, w2_ref[...], preferred_element_type=jnp.float32) + b2_ref[...]
    h2 = jnp.maximum(h2, 0.0)
    # Linear 3 + tanh  (tanh goes to the EUP; store is a full-128-lane vst)
    mu = jnp.tanh(jnp.dot(h2, w3_ref[...], preferred_element_type=jnp.float32) + b3_ref[...])
    mu_ref[...] = mu.astype(mu_ref.dtype)


def prepare_params(params):
    """One-time param prep (call at init, NOT per forward).

    Zero-pads the last layer to a full 128-lane output slab so the kernel's mu
    store is lane-dense.  Hoisted here so the padding is not re-executed as
    side XLA ops on every env step.
    """
    H, A = params["w3"].shape
    A_pad = _round_up(A, LANES)
    w3_pad = jnp.zeros((H, A_pad), params["w3"].dtype).at[:, :A].set(params["w3"])
    b3_pad = jnp.zeros((1, A_pad), params["b3"].dtype).at[:, :A].set(params["b3"])
    return {
        "w1": params["w1"], "b1": params["b1"],
        "w2": params["w2"], "b2": params["b2"],
        "w3_pad": w3_pad, "b3_pad": b3_pad,
    }


def _choose_batch_tile(B, block_b):
    """Sublane-aligned batch tile; big tiles, but keep >= 2 grid steps when the
    batch allows so the 'parallel' axis shards across both v7x TensorCores."""
    tb = min(block_b, _round_up(B, SUBLANES))
    tb = _round_up(tb, SUBLANES)
    if tb >= B and B > 2 * SUBLANES:
        tb = _round_up(pl.cdiv(B, 2), SUBLANES)
    return max(tb, SUBLANES)


def actor_forward(obs, std, prepared, *, action_dim, block_b=1024):
    """Returns (mu, std) — the parameters of utils.TruncatedNormal(mu, std)."""
    obs = jnp.asarray(obs, jnp.float32)
    B, repr_dim = obs.shape
    H = prepared["w1"].shape[1]
    A_pad = prepared["w3_pad"].shape[1]
    A = action_dim

    TB = _choose_batch_tile(B, block_b)
    grid = (pl.cdiv(B, TB),)

    const = lambda i: (0, 0)   # weights: same block every grid step -> stay resident

    # Advisory cost hint for XLA's scheduler around the custom call.
    flops = 2 * B * (repr_dim * H + H * H + H * A_pad) + 2 * B * (2 * H + A_pad)
    bytes_accessed = 4 * (B * repr_dim + B * A_pad
                          + repr_dim * H + H * H + H * A_pad + 2 * H + A_pad)
    cost = pl.CostEstimate(flops=int(flops),
                           transcendentals=int(B * A_pad),
                           bytes_accessed=int(bytes_accessed))

    mu_pad = pl.pallas_call(
        actor_kernel,
        out_shape=jax.ShapeDtypeStruct((B, A_pad), jnp.float32),
        grid=grid,
        in_specs=[
            pl.BlockSpec((TB, repr_dim), lambda i: (i, 0)),   # obs tile (ragged tail OK)
            pl.BlockSpec((repr_dim, H), const),               # w1
            pl.BlockSpec((1, H), const),                      # b1
            pl.BlockSpec((H, H), const),                      # w2
            pl.BlockSpec((1, H), const),                      # b2
            pl.BlockSpec((H, A_pad), const),                  # w3 (lane-padded)
            pl.BlockSpec((1, A_pad), const),                  # b3 (lane-padded)
        ],
        out_specs=pl.BlockSpec((TB, A_pad), lambda i: (i, 0)),
        compiler_params=pltpu.CompilerParams(
            dimension_semantics=("parallel",)),
        cost_estimate=cost,
    )(obs, prepared["w1"], prepared["b1"], prepared["w2"], prepared["b2"],
      prepared["w3_pad"], prepared["b3_pad"])

    mu = mu_pad[:, :A]
    # std = torch.ones_like(mu) * std — pure constant broadcast, done outside the kernel.
    std_out = jnp.full((B, A), std, dtype=jnp.float32)
    # TODO(synk): TruncatedNormal distribution object (sampling / log_prob) has no
    # Pallas equivalent here; we return its parameters (mu, std).
    return mu, std_out


def init_params(key, repr_dim, hidden_dim, action_dim):
    """Deterministic synthetic init (stand-in for utils.weight_init orthogonal init)."""
    k1, k2, k3 = jax.random.split(key, 3)
    scale = 0.1
    return {
        "w1": scale * jax.random.normal(k1, (repr_dim, hidden_dim), jnp.float32),
        "b1": jnp.zeros((1, hidden_dim), jnp.float32),
        "w2": scale * jax.random.normal(k2, (hidden_dim, hidden_dim), jnp.float32),
        "b2": jnp.zeros((1, hidden_dim), jnp.float32),
        "w3": scale * jax.random.normal(k3, (hidden_dim, action_dim), jnp.float32),
        "b3": jnp.zeros((1, action_dim), jnp.float32),
    }


if __name__ == "__main__":
    # Small shapes consistent with the module's forward: obs (B, repr_dim).
    B, REPR_DIM, HIDDEN_DIM, ACTION_DIM = 8, 32, 32, 4
    STD = 0.2

    key = jax.random.PRNGKey(0)
    k_obs, k_params = jax.random.split(key)
    obs = jax.random.normal(k_obs, (B, REPR_DIM), jnp.float32)
    params = init_params(k_params, REPR_DIM, HIDDEN_DIM, ACTION_DIM)

    # One-time padding / prep (hoisted out of the per-step call), then jit the
    # forward so the slice + std-fill side ops fuse with the custom call.
    prepared = prepare_params(params)
    actor_apply = jax.jit(functools.partial(actor_forward, action_dim=ACTION_DIM))

    mu, std_out = actor_apply(obs, STD, prepared)
    jax.block_until_ready((mu, std_out))

    # Cross-check against a pure-JAX reference of the same math.
    h1 = jnp.maximum(obs @ params["w1"] + params["b1"], 0.0)
    h2 = jnp.maximum(h1 @ params["w2"] + params["b2"], 0.0)
    mu_ref = jnp.tanh(h2 @ params["w3"] + params["b3"])
    assert mu.shape == (B, ACTION_DIM)
    assert std_out.shape == (B, ACTION_DIM)
    assert jnp.allclose(mu, mu_ref, atol=1e-5), "mu mismatch"
    assert jnp.allclose(std_out, jnp.full_like(mu_ref, STD)), "std mismatch"

    print("KERNEL_OK")
</pallas_src>

<mosaic_0001>
module attributes {stable_mosaic.version = 11 : i64} {
  func.func @actor_kernel(%arg0: i32, %arg1: memref<8x32xf32, #tpu.memory_space<vmem>>, %arg2: memref<32x32xf32, #tpu.memory_space<vmem>>, %arg3: memref<1x32xf32, #tpu.memory_space<vmem>>, %arg4: memref<32x32xf32, #tpu.memory_space<vmem>>, %arg5: memref<1x32xf32, #tpu.memory_space<vmem>>, %arg6: memref<32x128xf32, #tpu.memory_space<vmem>>, %arg7: memref<1x128xf32, #tpu.memory_space<vmem>>, %arg8: memref<8x128xf32, #tpu.memory_space<vmem>>) attributes {dimension_semantics = [#tpu.dimension_semantics<parallel>], iteration_bounds = array<i64: 1>, scalar_prefetch = 0 : i64, scratch_operands = 0 : i64, tpu.core_type = #tpu.core_type<tc>, window_params = [{transform_indices = @transform_0, window_bounds = array<i64: 8, 32>}, {pipeline_mode = #tpu.pipeline_mode<synchronous>, transform_indices = @transform_1, window_bounds = array<i64: 32, 32>}, {pipeline_mode = #tpu.pipeline_mode<synchronous>, transform_indices = @transform_2, window_bounds = array<i64: 1, 32>}, {pipeline_mode = #tpu.pipeline_mode<synchronous>, transform_indices = @transform_3, window_bounds = array<i64: 32, 32>}, {pipeline_mode = #tpu.pipeline_mode<synchronous>, transform_indices = @transform_4, window_bounds = array<i64: 1, 32>}, {pipeline_mode = #tpu.pipeline_mode<synchronous>, transform_indices = @transform_5, window_bounds = array<i64: 32, 128>}, {pipeline_mode = #tpu.pipeline_mode<synchronous>, transform_indices = @transform_6, window_bounds = array<i64: 1, 128>}, {transform_indices = @transform_7, window_bounds = array<i64: 8, 128>}]} {
    %c0 = arith.constant 0 : index
    %c0_0 = arith.constant 0 : index
    %0 = vector.load %arg1[%c0, %c0_0] : memref<8x32xf32, #tpu.memory_space<vmem>>, vector<8x32xf32>
    %c0_1 = arith.constant 0 : index
    %c0_2 = arith.constant 0 : index
    %1 = vector.load %arg2[%c0_1, %c0_2] : memref<32x32xf32, #tpu.memory_space<vmem>>, vector<32x32xf32>
    %cst = arith.constant dense<0.000000e+00> : vector<8x32xf32>
    %2 = tpu.matmul %0, %1, %cst {dimension_numbers = #tpu.dot_dimension_numbers<[1], [0], [0], [1], [0, 0, 1, 1], [], []>} : vector<8x32xf32>, vector<32x32xf32>, vector<8x32xf32> -> vector<8x32xf32>
    %c0_3 = arith.constant 0 : index
    %c0_4 = arith.constant 0 : index
    %3 = vector.load %arg3[%c0_3, %c0_4] : memref<1x32xf32, #tpu.memory_space<vmem>>, vector<1x32xf32>
    %4 = vector.broadcast %3 : vector<1x32xf32> to vector<8x32xf32>
    %5 = arith.addf %2, %4 : vector<8x32xf32>
    %cst_5 = arith.constant 0.000000e+00 : f32
    %6 = vector.broadcast %cst_5 : f32 to vector<8x32xf32>
    %7 = arith.maximumf %5, %6 : vector<8x32xf32>
    %c0_6 = arith.constant 0 : index
    %c0_7 = arith.constant 0 : index
    %8 = vector.load %arg4[%c0_6, %c0_7] : memref<32x32xf32, #tpu.memory_space<vmem>>, vector<32x32xf32>
    %cst_8 = arith.constant dense<0.000000e+00> : vector<8x32xf32>
    %9 = tpu.matmul %7, %8, %cst_8 {dimension_numbers = #tpu.dot_dimension_numbers<[1], [0], [0], [1], [0, 0, 1, 1], [], []>} : vector<8x32xf32>, vector<32x32xf32>, vector<8x32xf32> -> vector<8x32xf32>
    %c0_9 = arith.constant 0 : index
    %c0_10 = arith.constant 0 : index
    %10 = vector.load %arg5[%c0_9, %c0_10] : memref<1x32xf32, #tpu.memory_space<vmem>>, vector<1x32xf32>
    %11 = vector.broadcast %10 : vector<1x32xf32> to vector<8x32xf32>
    %12 = arith.addf %9, %11 : vector<8x32xf32>
    %cst_11 = arith.constant 0.000000e+00 : f32
    %13 = vector.broadcast %cst_11 : f32 to vector<8x32xf32>
    %14 = arith.maximumf %12, %13 : vector<8x32xf32>
    %c0_12 = arith.constant 0 : index
    %c0_13 = arith.constant 0 : index
    %15 = vector.load %arg6[%c0_12, %c0_13] : memref<32x128xf32, #tpu.memory_space<vmem>>, vector<32x128xf32>
    %cst_14 = arith.constant dense<0.000000e+00> : vector<8x128xf32>
    %16 = tpu.matmul %14, %15, %cst_14 {dimension_numbers = #tpu.dot_dimension_numbers<[1], [0], [0], [1], [0, 0, 1, 1], [], []>} : vector<8x32xf32>, vector<32x128xf32>, vector<8x128xf32> -> vector<8x128xf32>
    %c0_15 = arith.constant 0 : index
    %c0_16 = arith.constant 0 : index
    %17 = vector.load %arg7[%c0_15, %c0_16] : memref<1x128xf32, #tpu.memory_space<vmem>>, vector<1x128xf32>
    %18 = vector.broadcast %17 : vector<1x128xf32> to vector<8x128xf32>
    %19 = arith.addf %16, %18 : vector<8x128xf32>
    %20 = math.tanh %19 : vector<8x128xf32>
    %c0_17 = arith.constant 0 : index
    %c0_18 = arith.constant 0 : index
    %21 = vector.load %arg8[%c0_17, %c0_18] : memref<8x128xf32, #tpu.memory_space<vmem>>, vector<8x128xf32>
    tpu.vector_store %arg8[%c0_17, %c0_18], %20 {strides = array<i32>} : memref<8x128xf32, #tpu.memory_space<vmem>>, vector<8x128xf32>,
    return
  }
  func.func @transform_0(%arg0: i32) -> (i32, i32) {
    %c0_i32 = arith.constant 0 : i32
    %c0_i32_0 = arith.constant 0 : i32
    return %arg0, %c0_i32 : i32, i32
  }
  func.func @transform_1(%arg0: i32) -> (i32, i32) {
    %c0_i32 = arith.constant 0 : i32
    %c0_i32_0 = arith.constant 0 : i32
    %c0_i32_1 = arith.constant 0 : i32
    return %c0_i32, %c0_i32_0 : i32, i32
  }
  func.func @transform_2(%arg0: i32) -> (i32, i32) {
    %c0_i32 = arith.constant 0 : i32
    %c0_i32_0 = arith.constant 0 : i32
    %c0_i32_1 = arith.constant 0 : i32
    return %c0_i32, %c0_i32_0 : i32, i32
  }
  func.func @transform_3(%arg0: i32) -> (i32, i32) {
    %c0_i32 = arith.constant 0 : i32
    %c0_i32_0 = arith.constant 0 : i32
    %c0_i32_1 = arith.constant 0 : i32
    return %c0_i32, %c0_i32_0 : i32, i32
  }
  func.func @transform_4(%arg0: i32) -> (i32, i32) {
    %c0_i32 = arith.constant 0 : i32
    %c0_i32_0 = arith.constant 0 : i32
    %c0_i32_1 = arith.constant 0 : i32
    return %c0_i32, %c0_i32_0 : i32, i32
  }
  func.func @transform_5(%arg0: i32) -> (i32, i32) {
    %c0_i32 = arith.constant 0 : i32
    %c0_i32_0 = arith.constant 0 : i32
    %c0_i32_1 = arith.constant 0 : i32
    return %c0_i32, %c0_i32_0 : i32, i32
  }
  func.func @transform_6(%arg0: i32) -> (i32, i32) {
    %c0_i32 = arith.constant 0 : i32
    %c0_i32_0 = arith.constant 0 : i32
    %c0_i32_1 = arith.constant 0 : i32
    return %c0_i32, %c0_i32_0 : i32, i32
  }
  func.func @transform_7(%arg0: i32) -> (i32, i32) {
    %c0_i32 = arith.constant 0 : i32
    %c0_i32_0 = arith.constant 0 : i32
    return %arg0, %c0_i32 : i32, i32
  }
}

</mosaic_0001>

<llo_original>
// kernel: actor_forward.1
$region0: #{actor_forward.1}
  #allocation0 [shape = 'u32[]', space=smem, size = 0x4, offset = 0x4, fixed_abs, tag = 'smem constant byte address 0x4 - core index']
  #allocation1 [shape = 'u32[72,128]{1,0:T(1,128)}', space=vmem, size = 0x9000, scoped, tag = 'internal scratch']
  %s0 = inlined_call_operand.hbm [shape: f32[8,32], index: 0, kind: input, shape index: {}]
  %s1 = inlined_call_operand.hbm [shape: f32[32,32], index: 1, kind: input, shape index: {}]
  %s2 = inlined_call_operand.vmem [shape: f32[1,32], index: 2, kind: input, shape index: {}]
  %s3 = inlined_call_operand.hbm [shape: f32[32,32], index: 3, kind: input, shape index: {}]
  %s4 = inlined_call_operand.vmem [shape: f32[1,32], index: 4, kind: input, shape index: {}]
  %s5 = inlined_call_operand.hbm [shape: f32[32,128], index: 5, kind: input, shape index: {}]
  %s6 = inlined_call_operand.vmem [shape: f32[1,128], index: 6, kind: input, shape index: {}]
  %s7 = inlined_call_operand.vmem [shape: f32[8,128], index: 7, kind: output, shape index: {}]
  %s8 = sld [smem:[#allocation0]]
  $region54: #{actor_forward.1} parent=0
    _
  %s10 = ssub.s32 1, %s8
  %s11 = scalar_select 0, %s10, %s8
  $region1: #{actor_forward.1} parent=0
    #allocation2 [shape = 'u8[4096]{0}', space=vmem, size = 0x1000, scoped, tag = 'input window, operand 0, single buffered']
    #allocation3 [shape = 's32[1]{0}', space=sflag, size = 0x4, scoped, tag = 'scoped memory for actor_forward.1']
    #allocation4 [shape = 'u8[16384]{0}', space=vmem, size = 0x4000, scoped, tag = 'input window, operand 1, single buffered']
    #allocation5 [shape = 's32[1]{0}', space=sflag, size = 0x4, scoped, tag = 'scoped memory for actor_forward.1']
    #allocation6 [shape = 'u8[16384]{0}', space=vmem, size = 0x4000, scoped, tag = 'input window, operand 3, single buffered']
    #allocation7 [shape = 'u8[16384]{0}', space=vmem, size = 0x4000, scoped, tag = 'input window, operand 5, single buffered']
    #allocation8 [shape = 's32[1]{0}', space=sflag, size = 0x4, scoped, tag = 'scoped memory for actor_forward.1']
    %12 = vsyncpa [#allocation3], 0
    %13 = vsyncpa [#allocation5], 0
    %14 = vsyncpa [#allocation8], 0
    // Predicated region
    $region2: #{actor_forward.1} parent=1 // pred_check
      _
    $region3: #{actor_forward.1} parent=1 // pred_check_branch
      %16 = sbr.rel (0) target = $region5
    $region4: #{actor_forward.1} parent=1 // pred_region
      %18 = vsyncadd [#allocation3], 0
      %s20 = sshll.u32 %s0, 4
      %s21 = int_to_ptr.hbm [resolvable:$true] %s20
      %s22 = sshll.u32 [#allocation2], 4
      %s23 = int_to_ptr.vmem [resolvable:$true] %s22
      %25 = dma.hbm_to_vmem [thread:$0]  %s21, 128, %s23, [#allocation3]
    $region5: #{actor_forward.1} parent=1 // pred_fallthru
      _
    // Predicated region
    $region6: #{actor_forward.1} parent=1 // pred_check
      _
    $region7: #{actor_forward.1} parent=1 // pred_check_branch
      %27 = sbr.rel (0) target = $region9
    $region8: #{actor_forward.1} parent=1 // pred_region
      %29 = vsyncadd [#allocation5], 0
      %s30 = sshll.u32 %s1, 4
      %s31 = int_to_ptr.hbm [resolvable:$true] %s30
      %s32 = sshll.u32 [#allocation4], 4
      %s33 = int_to_ptr.vmem [resolvable:$true] %s32
      %38 = dma.hbm_to_vmem [thread:$0]  %s31, 512, %s33, [#allocation5], 128, 128, 8
    $region9: #{actor_forward.1} parent=1 // pred_fallthru
      _
    // Predicated region
    $region10: #{actor_forward.1} parent=1 // pred_check
      _
    $region11: #{actor_forward.1} parent=1 // pred_check_branch
      %40 = sbr.rel (0) target = $region13
    $region12: #{actor_forward.1} parent=1 // pred_region
      _
    $region13: #{actor_forward.1} parent=1 // pred_fallthru
      _
    // Predicated region
    $region14: #{actor_forward.1} parent=1 // pred_check
      _
    $region15: #{actor_forward.1} parent=1 // pred_check_branch
      %42 = sbr.rel (0) target = $region17
    $region16: #{actor_forward.1} parent=1 // pred_region
      %44 = vsyncadd [#allocation5], 0
      %s45 = sshll.u32 %s3, 4
      %s46 = int_to_ptr.hbm [resolvable:$true] %s45
      %s47 = sshll.u32 [#allocation6], 4
      %s48 = int_to_ptr.vmem [resolvable:$true] %s47
      %53 = dma.hbm_to_vmem [thread:$0]  %s46, 512, %s48, [#allocation5], 128, 128, 8
    $region17: #{actor_forward.1} parent=1 // pred_fallthru
      _
    // Predicated region
    $region18: #{actor_forward.1} parent=1 // pred_check
      _
    $region19: #{actor_forward.1} parent=1 // pred_check_branch
      %55 = sbr.rel (0) target = $region21
    $region20: #{actor_forward.1} parent=1 // pred_region
      _
    $region21: #{actor_forward.1} parent=1 // pred_fallthru
      _
    // Predicated region
    $region22: #{actor_forward.1} parent=1 // pred_check
      _
    $region23: #{actor_forward.1} parent=1 // pred_check_branch
      %57 = sbr.rel (0) target = $region25
    $region24: #{actor_forward.1} parent=1 // pred_region
      %59 = vsyncadd [#allocation8], 0
      %s60 = sshll.u32 %s5, 4
      %s61 = int_to_ptr.hbm [resolvable:$true] %s60
      %s62 = sshll.u32 [#allocation7], 4
      %s63 = int_to_ptr.vmem [resolvable:$true] %s62
      %68 = dma.hbm_to_vmem [thread:$0]  %s61, 512, %s63, [#allocation8], 128, 128, 8
    $region25: #{actor_forward.1} parent=1 // pred_fallthru
      _
    // Predicated region
    $region26: #{actor_forward.1} parent=1 // pred_check
      _
    $region27: #{actor_forward.1} parent=1 // pred_check_branch
      %70 = sbr.rel (0) target = $region29
    $region28: #{actor_forward.1} parent=1 // pred_region
      _
    $region29: #{actor_forward.1} parent=1 // pred_fallthru
      _
    // Predicated region
    $region30: #{actor_forward.1} parent=1 // pred_check
      _
    $region31: #{actor_forward.1} parent=1 // pred_check_branch
      %72 = sbr.rel (0) target = $region33
    $region32: #{actor_forward.1} parent=1 // pred_region
      %74 = dma.done [#allocation3], 128
    $region33: #{actor_forward.1} parent=1 // pred_fallthru
      _
    // Predicated region
    $region34: #{actor_forward.1} parent=1 // pred_check
      _
    $region35: #{actor_forward.1} parent=1 // pred_check_branch
      %76 = sbr.rel (0) target = $region37
    $region36: #{actor_forward.1} parent=1 // pred_region
      %78 = dma.done [#allocation5], 512
    $region37: #{actor_forward.1} parent=1 // pred_fallthru
      _
    // Predicated region
    $region38: #{actor_forward.1} parent=1 // pred_check
      _
    $region39: #{actor_forward.1} parent=1 // pred_check_branch
      %80 = sbr.rel (0) target = $region41
    $region40: #{actor_forward.1} parent=1 // pred_region
      %82 = dma.done [#allocation5], 512
    $region41: #{actor_forward.1} parent=1 // pred_fallthru
      _
    // Predicated region
    $region42: #{actor_forward.1} parent=1 // pred_check
      _
    $region43: #{actor_forward.1} parent=1 // pred_check_branch
      %84 = sbr.rel (0) target = $region45
    $region44: #{actor_forward.1} parent=1 // pred_region
      %86 = dma.done [#allocation8], 512
    $region45: #{actor_forward.1} parent=1 // pred_fallthru
      _
    %v87 = vld [vmem:[#allocation2] sm:$0xff]
    %v88 = vld [vmem:[#allocation4] sm:$0xff]
    %v89 = vld [vmem:[#allocation4 + $0x8] sm:$0xff]
    %v90 = vld [vmem:[#allocation4 + $0x10] sm:$0xff]
    %v91 = vld [vmem:[#allocation4 + $0x18] sm:$0xff]
    %v92 = vld [vmem:[%s2] sm:$0x1]
    %v94 = vperm.slane %v92, 0
    %vm96 = vcmask 261120
    %v98 = vsel %vm96, %v87, 0
    %100 = vmatpush.msra.mxu0 0.0
    %101 = vmatpush.msra.mxu0 0.0
    %102 = vmatpush.msra.mxu0 0.0
    %103 = vmatpush.msra.mxu0 0.0
    %104 = vmatpush.msra.mxu0 0.0
    %105 = vmatpush.msra.mxu0 0.0
    %106 = vmatpush.msra.mxu0 0.0
    %107 = vmatpush.msra.mxu0 0.0
    %108 = vmatpush.msra.mxu0 0.0
    %109 = vmatpush.msra.mxu0 0.0
    %110 = vmatpush.msra.mxu0 0.0
    %111 = vmatpush.msra.mxu0 0.0
    %112 = vmatpush.msra.mxu0 %v91
    %113 = vmatpush.msra.mxu0 %v90
    %114 = vmatpush.msra.mxu0 %v89
    %115 = vmatpush.msra.mxu0 %v88
    %116 = vmatmul.f32.gmra.mxu0 %v98
    %v117 = vpop.f32.mrf.mxu0
    %v118 = vadd.f32 %v94, %v117
    %119 = vdwg.mxu0
    %v120 = vmax.f32 %v118, 0.0
    %v121 = vld [vmem:[#allocation6] sm:$0xff]
    %v122 = vld [vmem:[#allocation6 + $0x8] sm:$0xff]
    %v123 = vld [vmem:[#allocation6 + $0x10] sm:$0xff]
    %v124 = vld [vmem:[#allocation6 + $0x18] sm:$0xff]
    %v125 = vld [vmem:[%s4] sm:$0x1]
    %v127 = vperm.slane %v125, 0
    %v130 = vsel %vm96, %v120, 0
    %132 = vmatpush.msra.mxu0 0.0
    %133 = vmatpush.msra.mxu0 0.0
    %134 = vmatpush.msra.mxu0 0.0
    %135 = vmatpush.msra.mxu0 0.0
    %136 = vmatpush.msra.mxu0 0.0
    %137 = vmatpush.msra.mxu0 0.0
    %138 = vmatpush.msra.mxu0 0.0
    %139 = vmatpush.msra.mxu0 0.0
    %140 = vmatpush.msra.mxu0 0.0
    %141 = vmatpush.msra.mxu0 0.0
    %142 = vmatpush.msra.mxu0 0.0
    %143 = vmatpush.msra.mxu0 0.0
    %144 = vmatpush.msra.mxu0 %v124
    %145 = vmatpush.msra.mxu0 %v123
    %146 = vmatpush.msra.mxu0 %v122
    %147 = vmatpush.msra.mxu0 %v121
    %148 = vmatmul.f32.gmra.mxu0 %v130
    %v149 = vpop.f32.mrf.mxu0
    %v150 = vadd.f32 %v127, %v149
    %151 = vdwg.mxu0
    %v152 = vmax.f32 %v150, 0.0
    %v153 = vld [vmem:[#allocation7] sm:$0xff]
    %v154 = vld [vmem:[#allocation7 + $0x8] sm:$0xff]
    %v155 = vld [vmem:[#allocation7 + $0x10] sm:$0xff]
    %v156 = vld [vmem:[#allocation7 + $0x18] sm:$0xff]
    %v157 = vld [vmem:[%s6] sm:$0x1]
    %v159 = vperm.slane %v157, 0
    %v162 = vsel %vm96, %v152, 0
    %164 = vmatpush.msra.mxu0 0.0
    %165 = vmatpush.msra.mxu0 0.0
    %166 = vmatpush.msra.mxu0 0.0
    %167 = vmatpush.msra.mxu0 0.0
    %168 = vmatpush.msra.mxu0 0.0
    %169 = vmatpush.msra.mxu0 0.0
    %170 = vmatpush.msra.mxu0 0.0
    %171 = vmatpush.msra.mxu0 0.0
    %172 = vmatpush.msra.mxu0 0.0
    %173 = vmatpush.msra.mxu0 0.0
    %174 = vmatpush.msra.mxu0 0.0
    %175 = vmatpush.msra.mxu0 0.0
    %176 = vmatpush.msra.mxu0 %v156
    %177 = vmatpush.msra.mxu0 %v155
    %178 = vmatpush.msra.mxu0 %v154
    %179 = vmatpush.msra.mxu0 %v153
    %180 = vmatmul.f32.gmra.mxu0 %v162
    %v181 = vpop.f32.mrf.mxu0
    %v182 = vadd.f32 %v159, %v181
    %183 = vdwg.mxu0
    %v184 = vtanh.pop %v182
    %185 = vst [vmem:[%s7] sm:$0xff] %v184
    // Predicated region
    $region46: #{actor_forward.1} parent=1 // pred_check
      _
    $region47: #{actor_forward.1} parent=1 // pred_check_branch
      %187 = sbr.rel (0) target = $region49
    $region48: #{actor_forward.1} parent=1 // pred_region
      _
    $region49: #{actor_forward.1} parent=1 // pred_fallthru
      _
    // Predicated region
    $region50: #{actor_forward.1} parent=1 // pred_check
      _
    $region51: #{actor_forward.1} parent=1 // pred_check_branch
      %189 = sbr.rel (0) target = $region53
    $region52: #{actor_forward.1} parent=1 // pred_region
      _
    $region53: #{actor_forward.1} parent=1 // pred_fallthru
      _
    %190 = vsyncpa [#allocation3], 1
    %191 = vsyncpa [#allocation5], 1
    %192 = vsyncpa [#allocation8], 1

</llo_original>
